<compile_context>
chip_gen: v5e
topology: v5e:2x2
jax: 0.10.0
libtpu: 0.0.40
codegen_flags: <defaults>
</compile_context>

<pallas_src>
import jax
import jax.numpy as jnp
from jax.experimental import pallas as pl
from jax.experimental.pallas import tpu as pltpu

_LANE = 128
_SUBLANE = 8


def _round_up(x, m):
    return (x + m - 1) // m * m


def _cdiv(a, b):
    return -(-a // b)


def _actor_kernel(state_ref, w1_ref, b1_ref, w2_ref, b2_ref, w3_ref, b3_ref, u_ref):
    cd = w1_ref.dtype                                           # MXU compute dtype (bf16/f32)
    x = state_ref[...].astype(cd)                               # (TB, S)
    # fc1 + relu (f32 accumulation / bias / relu)
    h1 = jnp.dot(x, w1_ref[...], preferred_element_type=jnp.float32) + b1_ref[...]
    h1 = jnp.maximum(h1, 0.0)
    # fc2 + relu
    h2 = jnp.dot(h1.astype(cd), w2_ref[...], preferred_element_type=jnp.float32) + b2_ref[...]
    h2 = jnp.maximum(h2, 0.0)
    # fc3 + tanh
    u = jnp.tanh(jnp.dot(h2.astype(cd), w3_ref[...], preferred_element_type=jnp.float32) + b3_ref[...])
    u_ref[...] = u.astype(u_ref.dtype)                          # (TB, A)


def prepare_actor_params(params, compute_dtype=jnp.bfloat16):
    """Pad hidden dims to 128 lanes and cast weights to the MXU compute dtype.

    Done once, outside the forward, since params are reused across calls.
    Biases stay f32 (they are added to the f32 accumulator in-kernel).
    Zero padding is numerically inert: padded hidden lanes stay 0 through
    bias + ReLU and contribute nothing downstream.
    """
    w1, b1, w2, b2, w3, b3 = params
    S, H1 = w1.shape
    H2 = w2.shape[1]
    A = w3.shape[1]
    H1p, H2p = _round_up(H1, _LANE), _round_up(H2, _LANE)

    def pad(a, rows, cols, dtype):
        a = a.astype(dtype)
        return jnp.pad(a, ((0, rows - a.shape[0]), (0, cols - a.shape[1])))

    return dict(
        dims=(S, H1, H2, A, H1p, H2p),
        w1=pad(w1, S, H1p, compute_dtype),
        b1=pad(jnp.reshape(b1, (1, -1)), 1, H1p, jnp.float32),
        w2=pad(w2, H1p, H2p, compute_dtype),
        b2=pad(jnp.reshape(b2, (1, -1)), 1, H2p, jnp.float32),
        w3=pad(w3, H2p, A, compute_dtype),
        b3=jnp.reshape(b3, (1, -1)).astype(jnp.float32),
    )


def actor_forward(state, prepared, La_FV1=None, La_FV2=None, *, batch_tile=None):
    """Pallas equivalent of Actor.forward with safety_layer_enabled=False.

    La_FV1 / La_FV2 are accepted for signature parity but unused (as in the
    no-safety-layer branch of the reference module). Returns (u, u).
    """
    S, H1, H2, A, H1p, H2p = prepared["dims"]
    B, S_in = state.shape
    assert S_in == S, (S_in, S)

    # Batch tile: big enough to amortize the ~0.35 us per-step pipeline overhead,
    # and >= 2 grid steps for large batches so both v7x TensorCores get work.
    if batch_tile is None:
        if B >= 2 * 512:
            n_tiles = max(2, _cdiv(B, 2048))
            batch_tile = _cdiv(B, n_tiles)          # 512..2048-row tiles
        else:
            batch_tile = B                          # single step for small batches
    TB = min(_round_up(batch_tile, _SUBLANE), _round_up(B, _SUBLANE))
    Bp = _round_up(B, TB)
    grid_b = Bp // TB

    # Pad batch rows only if needed (padded rows produce tanh(b3) and are sliced off).
    xp = state if Bp == B else jnp.pad(state, ((0, Bp - B), (0, 0)))

    w_itemsize = jnp.dtype(prepared["w1"].dtype).itemsize
    w_bytes = (S * H1p + H1p * H2p + H2p * A) * w_itemsize
    b_bytes = (H1p + H2p + A) * 4

    # VMEM estimate: double-buffered state/out streams, single weight copy,
    # plus headroom for the f32 h1/h2 intermediates.  Covers v5e's 16 MiB
    # scoped default when TB is large; clamped to v7x's 64 MiB physical VMEM.
    vmem_est = (2 * TB * (S + A) * 4 + w_bytes + b_bytes
                + 2 * TB * max(H1p, H2p) * 4)
    vmem_limit = int(min(max(2 * vmem_est, 32 * 2**20), 64 * 2**20))

    cost = pl.CostEstimate(
        flops=2 * B * (S * H1 + H1 * H2 + H2 * A),
        transcendentals=B * A,
        bytes_accessed=B * (S + A) * 4 + w_bytes + b_bytes,
    )

    const = lambda shp: pl.BlockSpec(shp, lambda i: (0, 0))  # VMEM-resident weights

    u_pad = pl.pallas_call(
        _actor_kernel,
        grid=(grid_b,),
        in_specs=[
            pl.BlockSpec((TB, S), lambda i: (i, 0)),   # state: streamed, no lane padding
            const((S, H1p)), const((1, H1p)),
            const((H1p, H2p)), const((1, H2p)),
            const((H2p, A)), const((1, A)),
        ],
        out_specs=pl.BlockSpec((TB, A), lambda i: (i, 0)),  # true action_dim, no padded writeback
        out_shape=jax.ShapeDtypeStruct((Bp, A), state.dtype),
        compiler_params=pltpu.CompilerParams(
            dimension_semantics=("parallel",),          # batch axis across v7x TCs
            vmem_limit_bytes=vmem_limit),
        cost_estimate=cost,
    )(xp, prepared["w1"], prepared["b1"], prepared["w2"], prepared["b2"],
      prepared["w3"], prepared["b3"])

    u = u_pad if Bp == B else u_pad[:B]
    return u, u  # no safety layer -> (u, u); same array, no duplicate kernel store


def init_actor_params(key, state_dim, hidden_dims, action_dim, dtype=jnp.float32):
    """Deterministic init matching nn.Linear shapes (stored transposed: (in, out))."""
    k1, k2, k3, k4, k5, k6 = jax.random.split(key, 6)

    def lin(kw, kb, fan_in, fan_out):
        bound = 1.0 / jnp.sqrt(fan_in)
        w = jax.random.uniform(kw, (fan_in, fan_out), dtype, -bound, bound)
        b = jax.random.uniform(kb, (1, fan_out), dtype, -bound, bound)
        return w, b

    w1, b1 = lin(k1, k2, state_dim, hidden_dims[0])
    w2, b2 = lin(k3, k4, hidden_dims[0], hidden_dims[1])
    w3, b3 = lin(k5, k6, hidden_dims[1], action_dim)
    return (w1, b1, w2, b2, w3, b3)


def _reference(state, params):
    w1, b1, w2, b2, w3, b3 = params
    x = jnp.maximum(state @ w1 + b1, 0.0)
    x = jnp.maximum(x @ w2 + b2, 0.0)
    return jnp.tanh(x @ w3 + b3)


if __name__ == "__main__":
    # Small shapes consistent with the module.
    batch = 8
    state_dim = 32
    hidden_dims = (64, 64)
    action_dim = 8

    key = jax.random.PRNGKey(0)
    k_state, k_params, k_la, k_big = jax.random.split(key, 4)

    state = jax.random.normal(k_state, (batch, state_dim), jnp.float32)
    # La_FV1 / La_FV2 are extra forward args (unused without the safety layer).
    La_FV1 = jax.random.normal(k_la, (batch, 1), jnp.float32)
    La_FV2 = jax.random.normal(k_la, (batch, 1), jnp.float32)

    params = init_actor_params(k_params, state_dim, hidden_dims, action_dim)
    prepared_bf16 = prepare_actor_params(params, compute_dtype=jnp.bfloat16)  # default path
    prepared_f32 = prepare_actor_params(params, compute_dtype=jnp.float32)

    ref_small = _reference(state, params)

    # --- f32 path, tight tolerance ---
    u, u_out = actor_forward(state, prepared_f32, La_FV1, La_FV2)
    u = jax.block_until_ready(u)
    u_out = jax.block_until_ready(u_out)
    assert u.shape == (batch, action_dim)
    assert jnp.allclose(u, ref_small, atol=1e-5), "f32 mismatch vs reference"
    assert jnp.allclose(u_out, u), "second output must equal u"

    # --- default bf16 MXU path (f32 accumulation), looser tolerance ---
    u_bf16, _ = actor_forward(state, prepared_bf16, La_FV1, La_FV2)
    u_bf16 = jax.block_until_ready(u_bf16)
    assert jnp.allclose(u_bf16, ref_small, atol=5e-2), "bf16 path mismatch vs reference"

    # --- larger batch: auto tiling (>=2 grid steps), f32 weights ---
    big_batch = 1030  # not a multiple of the tile -> exercises batch padding + slice
    big_state = jax.random.normal(k_big, (big_batch, state_dim), jnp.float32)
    ref_big = _reference(big_state, params)

    u_auto, _ = actor_forward(big_state, prepared_f32)
    u_auto = jax.block_until_ready(u_auto)
    assert u_auto.shape == (big_batch, action_dim)
    assert jnp.allclose(u_auto, ref_big, atol=1e-5), "auto-tiled f32 mismatch vs reference"

    # --- explicit batch_tile sweep point (grid=3) + bf16 ---
    u_big_bf16, _ = actor_forward(big_state, prepared_bf16, batch_tile=512)
    u_big_bf16 = jax.block_until_ready(u_big_bf16)
    assert jnp.allclose(u_big_bf16, ref_big, atol=5e-2), "tiled bf16 mismatch vs reference"

    print("KERNEL_OK")
</pallas_src>

<mosaic_0001>
module attributes {stable_mosaic.version = 11 : i64} {
  func.func @_actor_kernel(%arg0: i32, %arg1: memref<8x32xf32, #tpu.memory_space<vmem>>, %arg2: memref<32x128xf32, #tpu.memory_space<vmem>>, %arg3: memref<1x128xf32, #tpu.memory_space<vmem>>, %arg4: memref<128x128xf32, #tpu.memory_space<vmem>>, %arg5: memref<1x128xf32, #tpu.memory_space<vmem>>, %arg6: memref<128x8xf32, #tpu.memory_space<vmem>>, %arg7: memref<1x8xf32, #tpu.memory_space<vmem>>, %arg8: memref<8x8xf32, #tpu.memory_space<vmem>>) attributes {dimension_semantics = [#tpu.dimension_semantics<parallel>], iteration_bounds = array<i64: 1>, scalar_prefetch = 0 : i64, scratch_operands = 0 : i64, tpu.core_type = #tpu.core_type<tc>, window_params = [{transform_indices = @transform_0, window_bounds = array<i64: 8, 32>}, {pipeline_mode = #tpu.pipeline_mode<synchronous>, transform_indices = @transform_1, window_bounds = array<i64: 32, 128>}, {pipeline_mode = #tpu.pipeline_mode<synchronous>, transform_indices = @transform_2, window_bounds = array<i64: 1, 128>}, {pipeline_mode = #tpu.pipeline_mode<synchronous>, transform_indices = @transform_3, window_bounds = array<i64: 128, 128>}, {pipeline_mode = #tpu.pipeline_mode<synchronous>, transform_indices = @transform_4, window_bounds = array<i64: 1, 128>}, {pipeline_mode = #tpu.pipeline_mode<synchronous>, transform_indices = @transform_5, window_bounds = array<i64: 128, 8>}, {pipeline_mode = #tpu.pipeline_mode<synchronous>, transform_indices = @transform_6, window_bounds = array<i64: 1, 8>}, {transform_indices = @transform_7, window_bounds = array<i64: 8, 8>}]} {
    %c0 = arith.constant 0 : index
    %c0_0 = arith.constant 0 : index
    %0 = vector.load %arg1[%c0, %c0_0] : memref<8x32xf32, #tpu.memory_space<vmem>>, vector<8x32xf32>
    %c0_1 = arith.constant 0 : index
    %c0_2 = arith.constant 0 : index
    %1 = vector.load %arg2[%c0_1, %c0_2] : memref<32x128xf32, #tpu.memory_space<vmem>>, vector<32x128xf32>
    %cst = arith.constant dense<0.000000e+00> : vector<8x128xf32>
    %2 = tpu.matmul %0, %1, %cst {dimension_numbers = #tpu.dot_dimension_numbers<[1], [0], [0], [1], [0, 0, 1, 1], [], []>} : vector<8x32xf32>, vector<32x128xf32>, vector<8x128xf32> -> vector<8x128xf32>
    %c0_3 = arith.constant 0 : index
    %c0_4 = arith.constant 0 : index
    %3 = vector.load %arg3[%c0_3, %c0_4] : memref<1x128xf32, #tpu.memory_space<vmem>>, vector<1x128xf32>
    %4 = vector.broadcast %3 : vector<1x128xf32> to vector<8x128xf32>
    %5 = arith.addf %2, %4 : vector<8x128xf32>
    %cst_5 = arith.constant 0.000000e+00 : f32
    %6 = vector.broadcast %cst_5 : f32 to vector<8x128xf32>
    %7 = arith.maximumf %5, %6 : vector<8x128xf32>
    %c0_6 = arith.constant 0 : index
    %c0_7 = arith.constant 0 : index
    %8 = vector.load %arg4[%c0_6, %c0_7] : memref<128x128xf32, #tpu.memory_space<vmem>>, vector<128x128xf32>
    %cst_8 = arith.constant dense<0.000000e+00> : vector<8x128xf32>
    %9 = tpu.matmul %7, %8, %cst_8 {dimension_numbers = #tpu.dot_dimension_numbers<[1], [0], [0], [1], [0, 0, 1, 1], [], []>} : vector<8x128xf32>, vector<128x128xf32>, vector<8x128xf32> -> vector<8x128xf32>
    %c0_9 = arith.constant 0 : index
    %c0_10 = arith.constant 0 : index
    %10 = vector.load %arg5[%c0_9, %c0_10] : memref<1x128xf32, #tpu.memory_space<vmem>>, vector<1x128xf32>
    %11 = vector.broadcast %10 : vector<1x128xf32> to vector<8x128xf32>
    %12 = arith.addf %9, %11 : vector<8x128xf32>
    %cst_11 = arith.constant 0.000000e+00 : f32
    %13 = vector.broadcast %cst_11 : f32 to vector<8x128xf32>
    %14 = arith.maximumf %12, %13 : vector<8x128xf32>
    %c0_12 = arith.constant 0 : index
    %c0_13 = arith.constant 0 : index
    %15 = vector.load %arg6[%c0_12, %c0_13] : memref<128x8xf32, #tpu.memory_space<vmem>>, vector<128x8xf32>
    %cst_14 = arith.constant dense<0.000000e+00> : vector<8x8xf32>
    %16 = tpu.matmul %14, %15, %cst_14 {dimension_numbers = #tpu.dot_dimension_numbers<[1], [0], [0], [1], [0, 0, 1, 1], [], []>} : vector<8x128xf32>, vector<128x8xf32>, vector<8x8xf32> -> vector<8x8xf32>
    %c0_15 = arith.constant 0 : index
    %c0_16 = arith.constant 0 : index
    %17 = vector.load %arg7[%c0_15, %c0_16] : memref<1x8xf32, #tpu.memory_space<vmem>>, vector<1x8xf32>
    %18 = vector.broadcast %17 : vector<1x8xf32> to vector<8x8xf32>
    %19 = arith.addf %16, %18 : vector<8x8xf32>
    %20 = math.tanh %19 : vector<8x8xf32>
    %c0_17 = arith.constant 0 : index
    %c0_18 = arith.constant 0 : index
    %21 = vector.load %arg8[%c0_17, %c0_18] : memref<8x8xf32, #tpu.memory_space<vmem>>, vector<8x8xf32>
    tpu.vector_store %arg8[%c0_17, %c0_18], %20 {strides = array<i32>} : memref<8x8xf32, #tpu.memory_space<vmem>>, vector<8x8xf32>,
    return
  }
  func.func @transform_0(%arg0: i32) -> (i32, i32) {
    %c0_i32 = arith.constant 0 : i32
    %c0_i32_0 = arith.constant 0 : i32
    return %arg0, %c0_i32 : i32, i32
  }
  func.func @transform_1(%arg0: i32) -> (i32, i32) {
    %c0_i32 = arith.constant 0 : i32
    %c0_i32_0 = arith.constant 0 : i32
    %c0_i32_1 = arith.constant 0 : i32
    return %c0_i32, %c0_i32_0 : i32, i32
  }
  func.func @transform_2(%arg0: i32) -> (i32, i32) {
    %c0_i32 = arith.constant 0 : i32
    %c0_i32_0 = arith.constant 0 : i32
    %c0_i32_1 = arith.constant 0 : i32
    return %c0_i32, %c0_i32_0 : i32, i32
  }
  func.func @transform_3(%arg0: i32) -> (i32, i32) {
    %c0_i32 = arith.constant 0 : i32
    %c0_i32_0 = arith.constant 0 : i32
    %c0_i32_1 = arith.constant 0 : i32
    return %c0_i32, %c0_i32_0 : i32, i32
  }
  func.func @transform_4(%arg0: i32) -> (i32, i32) {
    %c0_i32 = arith.constant 0 : i32
    %c0_i32_0 = arith.constant 0 : i32
    %c0_i32_1 = arith.constant 0 : i32
    return %c0_i32, %c0_i32_0 : i32, i32
  }
  func.func @transform_5(%arg0: i32) -> (i32, i32) {
    %c0_i32 = arith.constant 0 : i32
    %c0_i32_0 = arith.constant 0 : i32
    %c0_i32_1 = arith.constant 0 : i32
    return %c0_i32, %c0_i32_0 : i32, i32
  }
  func.func @transform_6(%arg0: i32) -> (i32, i32) {
    %c0_i32 = arith.constant 0 : i32
    %c0_i32_0 = arith.constant 0 : i32
    %c0_i32_1 = arith.constant 0 : i32
    return %c0_i32, %c0_i32_0 : i32, i32
  }
  func.func @transform_7(%arg0: i32) -> (i32, i32) {
    %c0_i32 = arith.constant 0 : i32
    %c0_i32_0 = arith.constant 0 : i32
    return %arg0, %c0_i32 : i32, i32
  }
}

</mosaic_0001>

<llo_original>
// kernel: tpu_custom_call.1
$region0: #{tpu_custom_call.1}
  #allocation0 [shape = 'u32[]', space=smem, size = 0x4, offset = 0x4, fixed_abs, tag = 'smem constant byte address 0x4 - core index']
  #allocation1 [shape = 'u32[72,128]{1,0:T(1,128)}', space=vmem, size = 0x9000, scoped, tag = 'internal scratch']
  %s0 = inlined_call_operand.vmem [shape: f32[8,32], index: 0, kind: input, shape index: {}]
  %s1 = inlined_call_operand.hbm [shape: f32[32,128], index: 1, kind: input, shape index: {}]
  %s2 = inlined_call_operand.vmem [shape: f32[1,128], index: 2, kind: input, shape index: {}]
  %s3 = inlined_call_operand.vmem [shape: f32[128,128], index: 3, kind: input, shape index: {}]
  %s4 = inlined_call_operand.vmem [shape: f32[1,128], index: 4, kind: input, shape index: {}]
  %s5 = inlined_call_operand.vmem [shape: f32[128,8], index: 5, kind: input, shape index: {}]
  %s6 = inlined_call_operand.vmem [shape: f32[1,8], index: 6, kind: input, shape index: {}]
  %s7 = inlined_call_operand.hbm [shape: f32[8,8], index: 7, kind: output, shape index: {}]
  %s8 = sld [smem:[#allocation0]]
  $region42: #{tpu_custom_call.1} parent=0
    _
  %s10 = ssub.s32 1, %s8
  %s11 = scalar_select 0, %s10, %s8
  $region1: #{tpu_custom_call.1} parent=0
    #allocation2 [shape = 'u8[16384]{0}', space=vmem, size = 0x4000, scoped, tag = 'input window, operand 1, single buffered']
    #allocation3 [shape = 's32[1]{0}', space=sflag, size = 0x4, scoped, tag = 'scoped memory for tpu_custom_call.1']
    #allocation4 [shape = 's32[1]{0}', space=sflag, size = 0x4, scoped, tag = 'scoped memory for tpu_custom_call.1']
    #allocation5 [shape = 'u8[4096]{0}', space=vmem, size = 0x1000, scoped, tag = 'output window, operand 0, single buffered']
    %12 = vsyncpa [#allocation3], 0
    %13 = vsyncpa [#allocation4], 0
    // Predicated region
    $region2: #{tpu_custom_call.1} parent=1 // pred_check
      _
    $region3: #{tpu_custom_call.1} parent=1 // pred_check_branch
      %15 = sbr.rel (0) target = $region5
    $region4: #{tpu_custom_call.1} parent=1 // pred_region
      _
    $region5: #{tpu_custom_call.1} parent=1 // pred_fallthru
      _
    // Predicated region
    $region6: #{tpu_custom_call.1} parent=1 // pred_check
      _
    $region7: #{tpu_custom_call.1} parent=1 // pred_check_branch
      %17 = sbr.rel (0) target = $region9
    $region8: #{tpu_custom_call.1} parent=1 // pred_region
      %19 = vsyncadd [#allocation3], 0
      %s20 = sshll.u32 %s1, 4
      %s21 = int_to_ptr.hbm [resolvable:$true] %s20
      %s22 = sshll.u32 [#allocation2], 4
      %s23 = int_to_ptr.vmem [resolvable:$true] %s22
      %28 = dma.hbm_to_vmem [thread:$0]  %s21, 512, %s23, [#allocation3], 128, 128, 8
    $region9: #{tpu_custom_call.1} parent=1 // pred_fallthru
      _
    // Predicated region
    $region10: #{tpu_custom_call.1} parent=1 // pred_check
      _
    $region11: #{tpu_custom_call.1} parent=1 // pred_check_branch
      %30 = sbr.rel (0) target = $region13
    $region12: #{tpu_custom_call.1} parent=1 // pred_region
      _
    $region13: #{tpu_custom_call.1} parent=1 // pred_fallthru
      _
    // Predicated region
    $region14: #{tpu_custom_call.1} parent=1 // pred_check
      _
    $region15: #{tpu_custom_call.1} parent=1 // pred_check_branch
      %32 = sbr.rel (0) target = $region17
    $region16: #{tpu_custom_call.1} parent=1 // pred_region
      _
    $region17: #{tpu_custom_call.1} parent=1 // pred_fallthru
      _
    // Predicated region
    $region18: #{tpu_custom_call.1} parent=1 // pred_check
      _
    $region19: #{tpu_custom_call.1} parent=1 // pred_check_branch
      %34 = sbr.rel (0) target = $region21
    $region20: #{tpu_custom_call.1} parent=1 // pred_region
      _
    $region21: #{tpu_custom_call.1} parent=1 // pred_fallthru
      _
    // Predicated region
    $region22: #{tpu_custom_call.1} parent=1 // pred_check
      _
    $region23: #{tpu_custom_call.1} parent=1 // pred_check_branch
      %36 = sbr.rel (0) target = $region25
    $region24: #{tpu_custom_call.1} parent=1 // pred_region
      _
    $region25: #{tpu_custom_call.1} parent=1 // pred_fallthru
      _
    // Predicated region
    $region26: #{tpu_custom_call.1} parent=1 // pred_check
      _
    $region27: #{tpu_custom_call.1} parent=1 // pred_check_branch
      %38 = sbr.rel (0) target = $region29
    $region28: #{tpu_custom_call.1} parent=1 // pred_region
      _
    $region29: #{tpu_custom_call.1} parent=1 // pred_fallthru
      _
    // Predicated region
    $region30: #{tpu_custom_call.1} parent=1 // pred_check
      _
    $region31: #{tpu_custom_call.1} parent=1 // pred_check_branch
      %40 = sbr.rel (0) target = $region33
    $region32: #{tpu_custom_call.1} parent=1 // pred_region
      %42 = dma.done [#allocation3], 512
    $region33: #{tpu_custom_call.1} parent=1 // pred_fallthru
      _
    %v43 = vld [vmem:[%s0] sm:$0xff]
    %v44 = vld [vmem:[#allocation2] sm:$0xff]
    %v45 = vld [vmem:[#allocation2 + $0x8] sm:$0xff]
    %v46 = vld [vmem:[#allocation2 + $0x10] sm:$0xff]
    %v47 = vld [vmem:[#allocation2 + $0x18] sm:$0xff]
    %v48 = vld [vmem:[%s2] sm:$0x1]
    %v50 = vperm.slane %v48, 0
    %vm52 = vcmask 261120
    %v54 = vsel %vm52, %v43, 0
    %56 = vmatpush.msra.mxu0 0.0
    %57 = vmatpush.msra.mxu0 0.0
    %58 = vmatpush.msra.mxu0 0.0
    %59 = vmatpush.msra.mxu0 0.0
    %60 = vmatpush.msra.mxu0 0.0
    %61 = vmatpush.msra.mxu0 0.0
    %62 = vmatpush.msra.mxu0 0.0
    %63 = vmatpush.msra.mxu0 0.0
    %64 = vmatpush.msra.mxu0 0.0
    %65 = vmatpush.msra.mxu0 0.0
    %66 = vmatpush.msra.mxu0 0.0
    %67 = vmatpush.msra.mxu0 0.0
    %68 = vmatpush.msra.mxu0 %v47
    %69 = vmatpush.msra.mxu0 %v46
    %70 = vmatpush.msra.mxu0 %v45
    %71 = vmatpush.msra.mxu0 %v44
    %72 = vmatmul.f32.gmra.mxu0 %v54
    %v73 = vpop.f32.mrf.mxu0
    %v74 = vadd.f32 %v50, %v73
    %75 = vdwg.mxu0
    %v76 = vmax.f32 %v74, 0.0
    %v77 = vld [vmem:[%s3] sm:$0xff]
    %v78 = vld [vmem:[%s3 + $0x8] sm:$0xff]
    %v79 = vld [vmem:[%s3 + $0x10] sm:$0xff]
    %v80 = vld [vmem:[%s3 + $0x18] sm:$0xff]
    %v81 = vld [vmem:[%s3 + $0x20] sm:$0xff]
    %v82 = vld [vmem:[%s3 + $0x28] sm:$0xff]
    %v83 = vld [vmem:[%s3 + $0x30] sm:$0xff]
    %v84 = vld [vmem:[%s3 + $0x38] sm:$0xff]
    %v85 = vld [vmem:[%s3 + $0x40] sm:$0xff]
    %v86 = vld [vmem:[%s3 + $0x48] sm:$0xff]
    %v87 = vld [vmem:[%s3 + $0x50] sm:$0xff]
    %v88 = vld [vmem:[%s3 + $0x58] sm:$0xff]
    %v89 = vld [vmem:[%s3 + $0x60] sm:$0xff]
    %v90 = vld [vmem:[%s3 + $0x68] sm:$0xff]
    %v91 = vld [vmem:[%s3 + $0x70] sm:$0xff]
    %v92 = vld [vmem:[%s3 + $0x78] sm:$0xff]
    %v93 = vld [vmem:[%s4] sm:$0x1]
    %v95 = vperm.slane %v93, 0
    %97 = vmatpush.msra.mxu0 %v92
    %98 = vmatpush.msra.mxu0 %v91
    %99 = vmatpush.msra.mxu0 %v90
    %100 = vmatpush.msra.mxu0 %v89
    %101 = vmatpush.msra.mxu0 %v88
    %102 = vmatpush.msra.mxu0 %v87
    %103 = vmatpush.msra.mxu0 %v86
    %104 = vmatpush.msra.mxu0 %v85
    %105 = vmatpush.msra.mxu0 %v84
    %106 = vmatpush.msra.mxu0 %v83
    %107 = vmatpush.msra.mxu0 %v82
    %108 = vmatpush.msra.mxu0 %v81
    %109 = vmatpush.msra.mxu0 %v80
    %110 = vmatpush.msra.mxu0 %v79
    %111 = vmatpush.msra.mxu0 %v78
    %112 = vmatpush.msra.mxu0 %v77
    %113 = vmatmul.f32.gmra.mxu0 %v76
    %v114 = vpop.f32.mrf.mxu0
    %v115 = vadd.f32 %v95, %v114
    %116 = vdwg.mxu0
    %v117 = vmax.f32 %v115, 0.0
    %v118 = vld [vmem:[%s5] sm:$0xff]
    %v119 = vld [vmem:[%s5 + $0x8] sm:$0xff]
    %v120 = vld [vmem:[%s5 + $0x10] sm:$0xff]
    %v121 = vld [vmem:[%s5 + $0x18] sm:$0xff]
    %v122 = vld [vmem:[%s5 + $0x20] sm:$0xff]
    %v123 = vld [vmem:[%s5 + $0x28] sm:$0xff]
    %v124 = vld [vmem:[%s5 + $0x30] sm:$0xff]
    %v125 = vld [vmem:[%s5 + $0x38] sm:$0xff]
    %v126 = vld [vmem:[%s5 + $0x40] sm:$0xff]
    %v127 = vld [vmem:[%s5 + $0x48] sm:$0xff]
    %v128 = vld [vmem:[%s5 + $0x50] sm:$0xff]
    %v129 = vld [vmem:[%s5 + $0x58] sm:$0xff]
    %v130 = vld [vmem:[%s5 + $0x60] sm:$0xff]
    %v131 = vld [vmem:[%s5 + $0x68] sm:$0xff]
    %v132 = vld [vmem:[%s5 + $0x70] sm:$0xff]
    %v133 = vld [vmem:[%s5 + $0x78] sm:$0xff]
    %v134 = vld [vmem:[%s6] sm:$0x1]
    %v136 = vperm.slane %v134, 0
    %138 = vmatpush.msra.mxu0 %v133
    %139 = vmatpush.msra.mxu0 %v132
    %140 = vmatpush.msra.mxu0 %v131
    %141 = vmatpush.msra.mxu0 %v130
    %142 = vmatpush.msra.mxu0 %v129
    %143 = vmatpush.msra.mxu0 %v128
    %144 = vmatpush.msra.mxu0 %v127
    %145 = vmatpush.msra.mxu0 %v126
    %146 = vmatpush.msra.mxu0 %v125
    %147 = vmatpush.msra.mxu0 %v124
    %148 = vmatpush.msra.mxu0 %v123
    %149 = vmatpush.msra.mxu0 %v122
    %150 = vmatpush.msra.mxu0 %v121
    %151 = vmatpush.msra.mxu0 %v120
    %152 = vmatpush.msra.mxu0 %v119
    %153 = vmatpush.msra.mxu0 %v118
    %154 = vmatmul.f32.gmra.mxu0 %v117
    %v155 = vpop.f32.mrf.mxu0
    %v156 = vadd.f32 %v136, %v155
    %157 = vdwg.mxu0
    %v158 = vtanh.pop %v156
    %vm159 = vcmask 64512
    %160 = vst.msk [vmem:[#allocation5] sm:$0xff] %vm159, %v158
    // Predicated region
    $region34: #{tpu_custom_call.1} parent=1 // pred_check
      _
    $region35: #{tpu_custom_call.1} parent=1 // pred_check_branch
      %162 = sbr.rel (0) target = $region37
    $region36: #{tpu_custom_call.1} parent=1 // pred_region
      %164 = vsyncadd [#allocation4], 0
      %s166 = sshll.u32 [#allocation5], 4
      %s167 = int_to_ptr.vmem [resolvable:$true] %s166
      %s168 = sshll.u32 %s7, 4
      %s169 = int_to_ptr.hbm [resolvable:$true] %s168
      %171 = dma.vmem_to_hbm [thread:$0]  %s167, 128, %s169, [#allocation4]
    $region37: #{tpu_custom_call.1} parent=1 // pred_fallthru
      _
    // Predicated region
    $region38: #{tpu_custom_call.1} parent=1 // pred_check
      _
    $region39: #{tpu_custom_call.1} parent=1 // pred_check_branch
      %173 = sbr.rel (0) target = $region41
    $region40: #{tpu_custom_call.1} parent=1 // pred_region
      %175 = dma.done [#allocation4], 128
    $region41: #{tpu_custom_call.1} parent=1 // pred_fallthru
      _
    %176 = vsyncpa [#allocation3], 1
    %177 = vsyncpa [#allocation4], 1

</llo_original>
